<compile_context>
chip_gen: v7x
topology: tpu7x:2x2x1
jax: 0.10.0
libtpu: 0.0.40
codegen_flags: <defaults>
</compile_context>

<pallas_src>
import jax
import jax.numpy as jnp
from jax.experimental import pallas as pl
from jax.experimental.pallas import tpu as pltpu

BN_EPS = 1e-5


# --------------------------------------------------------------------------
# Kernel 1: per-batch per-channel sum / sum-of-squares of the two 1x1-conv
#           linear paths (pre-BN).  Conv bias omitted: cancelled by BN mean.
# --------------------------------------------------------------------------
def stats_lin_kernel(g_ref, x_ref, wg_ref, wx_ref, o_ref):
    # g_ref: (1, F_l, TILE)  x_ref: (1, F_g, TILE)
    # wg_ref: (F_int, F_l)   wx_ref: (F_int, F_g)
    # o_ref: (1, F_int, 4) = [sum_g1, sumsq_g1, sum_x1, sumsq_x1]
    @pl.when(pl.program_id(1) == 0)
    def _init():
        o_ref[...] = jnp.zeros_like(o_ref)

    g1 = jnp.dot(wg_ref[...], g_ref[0], preferred_element_type=jnp.float32)
    x1 = jnp.dot(wx_ref[...], x_ref[0], preferred_element_type=jnp.float32)
    o_ref[0] += jnp.concatenate(
        [jnp.sum(g1, axis=1, keepdims=True),
         jnp.sum(g1 * g1, axis=1, keepdims=True),
         jnp.sum(x1, axis=1, keepdims=True),
         jnp.sum(x1 * x1, axis=1, keepdims=True)], axis=1)


# --------------------------------------------------------------------------
# Kernel 2: psi_lin = Wpsi @ ReLU(g1*scale1+shift1 + x1*scale2+shift2)
#           (folded BN on both paths) + accumulate psi_lin stats.
# --------------------------------------------------------------------------
def psi_lin_kernel(g_ref, x_ref, wg_ref, wx_ref, s1_ref, s2_ref, wpsi_ref,
                   plin_ref, pstats_ref):
    # s1_ref, s2_ref: (F_int, 2) = [scale, shift] ; wpsi_ref: (1, F_int)
    # plin_ref: (1, 1, TILE) ; pstats_ref: (1, 1, 2) = [sum, sumsq]
    @pl.when(pl.program_id(1) == 0)
    def _init():
        pstats_ref[...] = jnp.zeros_like(pstats_ref)

    g1 = jnp.dot(wg_ref[...], g_ref[0], preferred_element_type=jnp.float32)
    x1 = jnp.dot(wx_ref[...], x_ref[0], preferred_element_type=jnp.float32)
    a = jnp.maximum(g1 * s1_ref[:, 0:1] + s1_ref[:, 1:2]
                    + x1 * s2_ref[:, 0:1] + s2_ref[:, 1:2], 0.0)   # (F_int, T)
    p = jnp.dot(wpsi_ref[...], a, preferred_element_type=jnp.float32)  # (1, T)
    plin_ref[0] = p
    pstats_ref[0] += jnp.concatenate(
        [jnp.sum(p, axis=1, keepdims=True),
         jnp.sum(p * p, axis=1, keepdims=True)], axis=1)


# --------------------------------------------------------------------------
# Kernel 3: out = x * sigmoid(psi_lin * scale3 + shift3)   (pure elementwise)
# --------------------------------------------------------------------------
def gate_kernel(x_ref, plin_ref, s3_ref, o_ref):
    z = plin_ref[0] * s3_ref[0:1, 0:1] + s3_ref[0:1, 1:2]          # (1, TILE)
    psi = 1.0 / (1.0 + jnp.exp(-z))
    o_ref[0] = x_ref[0] * psi


# --------------------------------------------------------------------------
# Wrapper
# --------------------------------------------------------------------------
def _pick_tile_m(m, cap=2048):
    """Largest multiple-of-128 divisor of m, capped (m itself if m <= cap)."""
    if m <= cap:
        return m
    t = (cap // 128) * 128
    while t >= 128:
        if m % t == 0:
            return t
        t -= 128
    return m  # fallback: single tile


def _fold_bn(s, ss, count, gamma, beta):
    mean = s / count
    var = ss / count - mean * mean
    scale = gamma * jax.lax.rsqrt(var + BN_EPS)
    shift = beta - mean * scale
    return scale, shift


def spatial_attention(g, x, params):
    """forward(g, x) of SpatialAttention.  g: (N,F_l,H,W), x: (N,F_g,H,W)."""
    N, F_l, H, W = g.shape
    _, F_g, _, _ = x.shape
    F_int = params["wg"].shape[0]
    M = H * W
    assert M % 128 == 0, "H*W must be a multiple of 128 for lane-dense tiling"
    TILE = _pick_tile_m(M)
    T = M // TILE

    g3 = g.reshape(N, F_l, M)          # free reshape, stays lane-dense
    x3 = x.reshape(N, F_g, M)
    wg, wx, wpsi = params["wg"], params["wx"], params["wpsi"]
    cnt = float(N * M)

    def vconst(shape):                 # small resident VMEM parameter block
        return pl.BlockSpec(shape, lambda n, t: (0,) * len(shape))

    # ---- pass 1: stats of the two linear paths --------------------------
    stats1 = pl.pallas_call(
        stats_lin_kernel,
        out_shape=jax.ShapeDtypeStruct((N, F_int, 4), jnp.float32),
        grid=(N, T),
        in_specs=[
            pl.BlockSpec((1, F_l, TILE), lambda n, t: (n, 0, t)),
            pl.BlockSpec((1, F_g, TILE), lambda n, t: (n, 0, t)),
            vconst((F_int, F_l)),
            vconst((F_int, F_g)),
        ],
        out_specs=pl.BlockSpec((1, F_int, 4), lambda n, t: (n, 0, 0)),
        compiler_params=pltpu.CompilerParams(
            dimension_semantics=("parallel", "arbitrary")),
    )(g3, x3, wg, wx)

    s = jnp.sum(stats1, axis=0)                                   # (F_int, 4)
    sc1, sh1 = _fold_bn(s[:, 0], s[:, 1], cnt, params["gamma_g"], params["beta_g"])
    sc2, sh2 = _fold_bn(s[:, 2], s[:, 3], cnt, params["gamma_x"], params["beta_x"])
    s1 = jnp.stack([sc1, sh1], axis=1)                            # (F_int, 2)
    s2 = jnp.stack([sc2, sh2], axis=1)

    # ---- pass 2: attention pre-activation + its stats --------------------
    psi_lin, pstats = pl.pallas_call(
        psi_lin_kernel,
        out_shape=(jax.ShapeDtypeStruct((N, 1, M), jnp.float32),
                   jax.ShapeDtypeStruct((N, 1, 2), jnp.float32)),
        grid=(N, T),
        in_specs=[
            pl.BlockSpec((1, F_l, TILE), lambda n, t: (n, 0, t)),
            pl.BlockSpec((1, F_g, TILE), lambda n, t: (n, 0, t)),
            vconst((F_int, F_l)),
            vconst((F_int, F_g)),
            vconst((F_int, 2)),
            vconst((F_int, 2)),
            vconst((1, F_int)),
        ],
        out_specs=(pl.BlockSpec((1, 1, TILE), lambda n, t: (n, 0, t)),
                   pl.BlockSpec((1, 1, 2), lambda n, t: (n, 0, 0))),
        compiler_params=pltpu.CompilerParams(
            dimension_semantics=("parallel", "arbitrary")),
    )(g3, x3, wg, wx, s1, s2, wpsi)

    ps = jnp.sum(pstats, axis=0)                                  # (1, 2)
    sc3, sh3 = _fold_bn(ps[:, 0], ps[:, 1], cnt, params["gamma_p"], params["beta_p"])
    s3 = jnp.stack([sc3, sh3], axis=1)                            # (1, 2)

    # ---- pass 3: gate the skip features -----------------------------------
    out = pl.pallas_call(
        gate_kernel,
        out_shape=jax.ShapeDtypeStruct((N, F_g, M), jnp.float32),
        grid=(N, T),
        in_specs=[
            pl.BlockSpec((1, F_g, TILE), lambda n, t: (n, 0, t)),
            pl.BlockSpec((1, 1, TILE), lambda n, t: (n, 0, t)),
            vconst((1, 2)),
        ],
        out_specs=pl.BlockSpec((1, F_g, TILE), lambda n, t: (n, 0, t)),
        compiler_params=pltpu.CompilerParams(
            dimension_semantics=("parallel", "parallel")),
    )(x3, psi_lin, s3)

    return out.reshape(N, F_g, H, W)


# --------------------------------------------------------------------------
# Pure-JAX reference (train-mode BN, biased variance, biases included to
# demonstrate they are exactly cancelled by the kernel's bias-free path).
# --------------------------------------------------------------------------
def _ref_conv1x1(y, w, b):
    return jnp.einsum("oc,nchw->nohw", w, y) + b[None, :, None, None]


def _ref_bn(y, gamma, beta):
    mean = y.mean(axis=(0, 2, 3), keepdims=True)
    var = ((y - mean) ** 2).mean(axis=(0, 2, 3), keepdims=True)
    return ((y - mean) * jax.lax.rsqrt(var + BN_EPS)
            * gamma[None, :, None, None] + beta[None, :, None, None])


def ref_spatial_attention(g, x, p):
    g1 = _ref_bn(_ref_conv1x1(g, p["wg"], p["bg"]), p["gamma_g"], p["beta_g"])
    x1 = _ref_bn(_ref_conv1x1(x, p["wx"], p["bx"]), p["gamma_x"], p["beta_x"])
    a = jnp.maximum(g1 + x1, 0.0)
    z = _ref_bn(_ref_conv1x1(a, p["wpsi"], p["bpsi"]), p["gamma_p"], p["beta_p"])
    psi = jax.nn.sigmoid(z)
    return x * psi


def init_params(key, F_g, F_l, F_int):
    ks = jax.random.split(key, 12)
    return {
        "wg": 0.3 * jax.random.normal(ks[0], (F_int, F_l), jnp.float32),
        "bg": 0.1 * jax.random.normal(ks[1], (F_int,), jnp.float32),
        "gamma_g": 1.0 + 0.1 * jax.random.normal(ks[2], (F_int,), jnp.float32),
        "beta_g": 0.1 * jax.random.normal(ks[3], (F_int,), jnp.float32),
        "wx": 0.3 * jax.random.normal(ks[4], (F_int, F_g), jnp.float32),
        "bx": 0.1 * jax.random.normal(ks[5], (F_int,), jnp.float32),
        "gamma_x": 1.0 + 0.1 * jax.random.normal(ks[6], (F_int,), jnp.float32),
        "beta_x": 0.1 * jax.random.normal(ks[7], (F_int,), jnp.float32),
        "wpsi": 0.3 * jax.random.normal(ks[8], (1, F_int), jnp.float32),
        "bpsi": 0.1 * jax.random.normal(ks[9], (1,), jnp.float32),
        "gamma_p": 1.0 + 0.1 * jax.random.normal(ks[10], (1,), jnp.float32),
        "beta_p": 0.1 * jax.random.normal(ks[11], (1,), jnp.float32),
    }


if __name__ == "__main__":
    N, F_g, F_l, F_int, H, W = 2, 4, 4, 8, 16, 16
    key = jax.random.PRNGKey(0)
    kg, kx, kp = jax.random.split(key, 3)
    g = jax.random.normal(kg, (N, F_l, H, W), jnp.float32)   # gating signal (NCHW)
    x = jax.random.normal(kx, (N, F_g, H, W), jnp.float32)   # skip features (NCHW)
    params = init_params(kp, F_g, F_l, F_int)

    out = jax.block_until_ready(spatial_attention(g, x, params))
    ref = jax.block_until_ready(ref_spatial_attention(g, x, params))

    assert out.shape == x.shape, out.shape
    max_err = float(jnp.max(jnp.abs(out - ref)))
    assert jnp.allclose(out, ref, atol=1e-4, rtol=1e-4), max_err
    print("KERNEL_OK")
</pallas_src>

<mosaic_0001>
module attributes {stable_mosaic.version = 11 : i64} {
  func.func @stats_lin_kernel(%arg0: i32, %arg1: i32, %arg2: memref<1x4x256xf32, #tpu.memory_space<vmem>>, %arg3: memref<1x4x256xf32, #tpu.memory_space<vmem>>, %arg4: memref<8x4xf32, #tpu.memory_space<vmem>>, %arg5: memref<8x4xf32, #tpu.memory_space<vmem>>, %arg6: memref<1x8x4xf32, #tpu.memory_space<vmem>>) attributes {dimension_semantics = [#tpu.dimension_semantics<parallel>, #tpu.dimension_semantics<arbitrary>], iteration_bounds = array<i64: 2, 1>, scalar_prefetch = 0 : i64, scratch_operands = 0 : i64, tpu.core_type = #tpu.core_type<tc>, window_params = [{transform_indices = @transform_0, window_bounds = array<i64: 1, 4, 256>}, {transform_indices = @transform_1, window_bounds = array<i64: 1, 4, 256>}, {pipeline_mode = #tpu.pipeline_mode<synchronous>, transform_indices = @transform_2, window_bounds = array<i64: 8, 4>}, {pipeline_mode = #tpu.pipeline_mode<synchronous>, transform_indices = @transform_3, window_bounds = array<i64: 8, 4>}, {transform_indices = @transform_4, window_bounds = array<i64: 1, 8, 4>}]} {
    %c0_i32 = arith.constant 0 : i32
    %0 = arith.cmpi eq, %arg1, %c0_i32 : i32
    %1 = arith.extui %0 : i1 to i32
    %c0_i32_0 = arith.constant 0 : i32
    %2 = arith.cmpi ne, %1, %c0_i32_0 : i32
    scf.if %2 {
      %cst_21 = arith.constant 0.000000e+00 : f32
      %28 = vector.broadcast %cst_21 : f32 to vector<1x8x4xf32>
      %c0_22 = arith.constant 0 : index
      %c0_23 = arith.constant 0 : index
      %c0_24 = arith.constant 0 : index
      %29 = vector.load %arg6[%c0_22, %c0_23, %c0_24] : memref<1x8x4xf32, #tpu.memory_space<vmem>>, vector<1x8x4xf32>
      tpu.vector_store %arg6[%c0_22, %c0_23, %c0_24], %28 {strides = array<i32>} : memref<1x8x4xf32, #tpu.memory_space<vmem>>, vector<1x8x4xf32>,
    } else {
    }
    %c0 = arith.constant 0 : index
    %c0_1 = arith.constant 0 : index
    %3 = vector.load %arg4[%c0, %c0_1] : memref<8x4xf32, #tpu.memory_space<vmem>>, vector<8x4xf32>
    %c0_2 = arith.constant 0 : index
    %c0_3 = arith.constant 0 : index
    %c0_4 = arith.constant 0 : index
    %4 = vector.load %arg2[%c0_2, %c0_3, %c0_4] : memref<1x4x256xf32, #tpu.memory_space<vmem>>, vector<1x4x256xf32>
    %5 = vector.shape_cast %4 : vector<1x4x256xf32> to vector<4x256xf32>
    %cst = arith.constant dense<0.000000e+00> : vector<8x256xf32>
    %6 = tpu.matmul %3, %5, %cst {dimension_numbers = #tpu.dot_dimension_numbers<[1], [0], [0], [1], [0, 0, 1, 1], [], []>} : vector<8x4xf32>, vector<4x256xf32>, vector<8x256xf32> -> vector<8x256xf32>
    %c0_5 = arith.constant 0 : index
    %c0_6 = arith.constant 0 : index
    %7 = vector.load %arg5[%c0_5, %c0_6] : memref<8x4xf32, #tpu.memory_space<vmem>>, vector<8x4xf32>
    %c0_7 = arith.constant 0 : index
    %c0_8 = arith.constant 0 : index
    %c0_9 = arith.constant 0 : index
    %8 = vector.load %arg3[%c0_7, %c0_8, %c0_9] : memref<1x4x256xf32, #tpu.memory_space<vmem>>, vector<1x4x256xf32>
    %9 = vector.shape_cast %8 : vector<1x4x256xf32> to vector<4x256xf32>
    %cst_10 = arith.constant dense<0.000000e+00> : vector<8x256xf32>
    %10 = tpu.matmul %7, %9, %cst_10 {dimension_numbers = #tpu.dot_dimension_numbers<[1], [0], [0], [1], [0, 0, 1, 1], [], []>} : vector<8x4xf32>, vector<4x256xf32>, vector<8x256xf32> -> vector<8x256xf32>
    %c0_11 = arith.constant 0 : index
    %c0_12 = arith.constant 0 : index
    %c0_13 = arith.constant 0 : index
    %11 = vector.load %arg6[%c0_11, %c0_12, %c0_13] : memref<1x8x4xf32, #tpu.memory_space<vmem>>, vector<1x8x4xf32>
    %12 = vector.shape_cast %11 : vector<1x8x4xf32> to vector<8x4xf32>
    %cst_14 = arith.constant dense<0.000000e+00> : vector<8xf32>
    %13 = vector.multi_reduction <add>, %6, %cst_14 [1] : vector<8x256xf32> to vector<8xf32>
    %14 = vector.shape_cast %13 : vector<8xf32> to vector<8x1xf32>
    %15 = arith.mulf %6, %6 : vector<8x256xf32>
    %cst_15 = arith.constant dense<0.000000e+00> : vector<8xf32>
    %16 = vector.multi_reduction <add>, %15, %cst_15 [1] : vector<8x256xf32> to vector<8xf32>
    %17 = vector.shape_cast %16 : vector<8xf32> to vector<8x1xf32>
    %cst_16 = arith.constant dense<0.000000e+00> : vector<8xf32>
    %18 = vector.multi_reduction <add>, %10, %cst_16 [1] : vector<8x256xf32> to vector<8xf32>
    %19 = vector.shape_cast %18 : vector<8xf32> to vector<8x1xf32>
    %20 = arith.mulf %10, %10 : vector<8x256xf32>
    %cst_17 = arith.constant dense<0.000000e+00> : vector<8xf32>
    %21 = vector.multi_reduction <add>, %20, %cst_17 [1] : vector<8x256xf32> to vector<8xf32>
    %22 = vector.shape_cast %21 : vector<8xf32> to vector<8x1xf32>
    %23 = tpu.concatenate %14, %17, %19, %22 in 1 : vector<8x1xf32>, vector<8x1xf32>, vector<8x1xf32>, vector<8x1xf32> -> vector<8x4xf32>
    %24 = arith.addf %12, %23 : vector<8x4xf32>
    %c0_18 = arith.constant 0 : index
    %c0_19 = arith.constant 0 : index
    %c0_20 = arith.constant 0 : index
    %25 = vector.load %arg6[%c0_18, %c0_19, %c0_20] : memref<1x8x4xf32, #tpu.memory_space<vmem>>, vector<1x8x4xf32>
    %26 = vector.shape_cast %25 : vector<1x8x4xf32> to vector<8x4xf32>
    %27 = vector.shape_cast %24 : vector<8x4xf32> to vector<1x8x4xf32>
    tpu.vector_store %arg6[%c0_18, %c0_19, %c0_20], %27 {strides = array<i32>} : memref<1x8x4xf32, #tpu.memory_space<vmem>>, vector<1x8x4xf32>,
    return
  }
  func.func @transform_0(%arg0: i32, %arg1: i32) -> (i32, i32, i32) {
    %c0_i32 = arith.constant 0 : i32
    %c0_i32_0 = arith.constant 0 : i32
    return %arg0, %c0_i32, %arg1 : i32, i32, i32
  }
  func.func @transform_1(%arg0: i32, %arg1: i32) -> (i32, i32, i32) {
    %c0_i32 = arith.constant 0 : i32
    %c0_i32_0 = arith.constant 0 : i32
    return %arg0, %c0_i32, %arg1 : i32, i32, i32
  }
  func.func @transform_2(%arg0: i32, %arg1: i32) -> (i32, i32) {
    %c0_i32 = arith.constant 0 : i32
    %c0_i32_0 = arith.constant 0 : i32
    %c0_i32_1 = arith.constant 0 : i32
    return %c0_i32, %c0_i32_0 : i32, i32
  }
  func.func @transform_3(%arg0: i32, %arg1: i32) -> (i32, i32) {
    %c0_i32 = arith.constant 0 : i32
    %c0_i32_0 = arith.constant 0 : i32
    %c0_i32_1 = arith.constant 0 : i32
    return %c0_i32, %c0_i32_0 : i32, i32
  }
  func.func @transform_4(%arg0: i32, %arg1: i32) -> (i32, i32, i32) {
    %c0_i32 = arith.constant 0 : i32
    %c0_i32_0 = arith.constant 0 : i32
    %c0_i32_1 = arith.constant 0 : i32
    return %arg0, %c0_i32, %c0_i32_0 : i32, i32, i32
  }
}

</mosaic_0001>

<llo_original>
// kernel: tpu_custom_call.1
$region0: #{tpu_custom_call.1}
  #allocation0 [shape = 'u32[]', space=smem, size = 0x4, offset = 0x4, fixed_abs, tag = 'smem constant byte address 0x4 - core index']
  #allocation1 [shape = 'u32[144,128]{1,0:T(1,128)}', space=vmem, size = 0x12000, scoped, tag = 'internal scratch']
  %s0 = inlined_call_operand.vmem [shape: f32[2,4,256], index: 0, kind: input, shape index: {}]
  %s1 = inlined_call_operand.hbm [shape: f32[2,4,256], index: 1, kind: input, shape index: {}]
  %s2 = inlined_call_operand.vmem [shape: f32[8,4], index: 2, kind: input, shape index: {}]
  %s3 = inlined_call_operand.vmem [shape: f32[8,4], index: 3, kind: input, shape index: {}]
  %s4 = inlined_call_operand.vmem [shape: f32[2,8,4], index: 4, kind: output, shape index: {}]
  %s5 = sld [smem:[#allocation0]]
  $region57: #{tpu_custom_call.1} parent=0
    _
  %s7 = ssub.s32 1, %s5
  %s8 = scalar_select 0, %s7, %s5
  $region1: #{tpu_custom_call.1} parent=0
    #allocation2 [shape = 'u8[8192]{0}', space=vmem, size = 0x2000, scoped, tag = 'input window, operand 1']
    #allocation3 [shape = 's32[2]{0}', space=sflag, size = 0x8, scoped, tag = 'scoped memory for tpu_custom_call.1']
    %9 = vsyncpa [#allocation3], 0
    %s10 = scalar_lea.sflag [#allocation3], 1
    %11 = vsyncpa %s10, 0
    loop: start=0, step=1, limit=4
    $region2: #{tpu_custom_call.1} parent=1 // loop_pre_header
      _
    $region3: #{tpu_custom_call.1} parent=1 // loop_header
      %s13 = sphi 0, %s17
      %p14 = scmp.ge.s32.totalorder %s13, 4
      %s20 = sphi 0, %s32
      %s21 = sphi 0, %s28
      %s22 = sphi 0, %s20
      %s23 = sphi 0, %s21
      %s24 = sphi 0, %s22
      %s25 = sphi 0, %s23
      %s37 = sphi 0, %s39
      %s40 = sphi 0, %s37
      %s41 = sphi 0, %s40
      %s57 = sphi 0, %s41
      %s65 = sphi 0, %s67
      %s68 = sphi 0, %s65
      %s69 = sphi 0, %s68
      %s85 = sphi 0, %s69
      %s89 = sphi 0, %s89
      %s91 = sphi 0, %s89
      %s92 = sphi 0, %s91
      %s106 = sphi 0, %s92
      %s110 = sphi 0, %s110
      %s112 = sphi 0, %s110
      %s113 = sphi 0, %s112
      %s127 = sphi 0, %s113
      %s133 = sphi 0, %s135
      %s136 = sphi 0, %s133
      %s137 = sphi 0, %s136
      %s153 = sphi 0, %s137
    $region4: #{tpu_custom_call.1} parent=1 // loop_header_branch
      %16 = sbr.rel (%p14) target = $region8
    $region5: #{tpu_custom_call.1} parent=1 // loop_body
      %s18 = ssub.s32 %s13, 1
      %s19 = ssub.s32 %s13, 2
      %s26 = sadd.s32 1, %s21
      %p27 = scmp.ge.s32.totalorder %s26, 1
      %s28 = scalar_select %p27, 0, %s26
      %s29 = sadd.s32 1, %s20
      %s30 = scalar_select %p27, %s29, %s20
      %p31 = scmp.ge.s32.totalorder %s30, 2
      %s32 = scalar_select %p31, 0, %s30
      %s33 = ssub.s32 %s20, %s32
      %s34 = ssub.s32 %s21, %s28
      %s35 = sor.u32 %s33, %s34
      %p36 = scmp.eq.s32.totalorder %s35, 0
      %s38 = sadd.s32 %s37, 1
      %s39 = scalar_select %p36, %s37, %s38
      %p42 = pneg %p36
      %p43 = scmp.eq.s32.totalorder %s13, 1
      %p44 = por %p42, %p43
      %p45 = scmp.ne.s32.totalorder %s37, %s40
      %p46 = scmp.eq.s32.totalorder %s13, 0
      %p47 = por %p45, %p46
      %p48 = scmp.ne.s32.totalorder %s37, %s40
      %p49 = scmp.eq.s32.totalorder %s18, 1
      %p50 = por %p48, %p49
      %p51 = scmp.ne.s32.totalorder %s40, %s41
      %p52 = scmp.eq.s32.totalorder %s18, 0
      %p53 = por %p51, %p52
      %p54 = scmp.ne.s32.totalorder %s40, %s41
      %p55 = scmp.eq.s32.totalorder %s19, 1
      %p56 = por %p54, %p55
      %p58 = scmp.ne.s32.totalorder %s41, %s57
      %p59 = scmp.eq.s32.totalorder %s19, 0
      %p60 = por %p58, %p59
      %s61 = ssub.s32 %s20, %s32
      %s62 = ssub.s32 %s21, %s28
      %s63 = sor.u32 %s61, %s62
      %p64 = scmp.eq.s32.totalorder %s63, 0
      %s66 = sadd.s32 %s65, 1
      %s67 = scalar_select %p64, %s65, %s66
      %p70 = pneg %p64
      %p71 = scmp.eq.s32.totalorder %s13, 1
      %p72 = por %p70, %p71
      %p73 = scmp.ne.s32.totalorder %s65, %s68
      %p74 = scmp.eq.s32.totalorder %s13, 0
      %p75 = por %p73, %p74
      %p76 = scmp.ne.s32.totalorder %s65, %s68
      %p77 = scmp.eq.s32.totalorder %s18, 1
      %p78 = por %p76, %p77
      %p79 = scmp.ne.s32.totalorder %s68, %s69
      %p80 = scmp.eq.s32.totalorder %s18, 0
      %p81 = por %p79, %p80
      %p82 = scmp.ne.s32.totalorder %s68, %s69
      %p83 = scmp.eq.s32.totalorder %s19, 1
      %p84 = por %p82, %p83
      %p86 = scmp.ne.s32.totalorder %s69, %s85
      %p87 = scmp.eq.s32.totalorder %s19, 0
      %p88 = por %p86, %p87
      %s90 = sadd.s32 %s89, 1
      %p93 = scmp.eq.s32.totalorder %s13, 1
      %p94 = scmp.ne.s32.totalorder %s89, %s91
      %p95 = scmp.eq.s32.totalorder %s13, 0
      %p96 = por %p94, %p95
      %p97 = scmp.ne.s32.totalorder %s89, %s91
      %p98 = scmp.eq.s32.totalorder %s18, 1
      %p99 = por %p97, %p98
      %p100 = scmp.ne.s32.totalorder %s91, %s92
      %p101 = scmp.eq.s32.totalorder %s18, 0
      %p102 = por %p100, %p101
      %p103 = scmp.ne.s32.totalorder %s91, %s92
      %p104 = scmp.eq.s32.totalorder %s19, 1
      %p105 = por %p103, %p104
      %p107 = scmp.ne.s32.totalorder %s92, %s106
      %p108 = scmp.eq.s32.totalorder %s19, 0
      %p109 = por %p107, %p108
      %s111 = sadd.s32 %s110, 1
      %p114 = scmp.eq.s32.totalorder %s13, 1
      %p115 = scmp.ne.s32.totalorder %s110, %s112
      %p116 = scmp.eq.s32.totalorder %s13, 0
      %p117 = por %p115, %p116
      %p118 = scmp.ne.s32.totalorder %s110, %s112
      %p119 = scmp.eq.s32.totalorder %s18, 1
      %p120 = por %p118, %p119
      %p121 = scmp.ne.s32.totalorder %s112, %s113
      %p122 = scmp.eq.s32.totalorder %s18, 0
      %p123 = por %p121, %p122
      %p124 = scmp.ne.s32.totalorder %s112, %s113
      %p125 = scmp.eq.s32.totalorder %s19, 1
      %p126 = por %p124, %p125
      %p128 = scmp.ne.s32.totalorder %s113, %s127
      %p129 = scmp.eq.s32.totalorder %s19, 0
      %p130 = por %p128, %p129
      %s131 = ssub.s32 %s20, %s32
      %p132 = scmp.eq.s32.totalorder %s131, 0
      %s134 = sadd.s32 %s133, 1
      %s135 = scalar_select %p132, %s133, %s134
      %p138 = pneg %p132
      %p139 = scmp.eq.s32.totalorder %s13, 1
      %p140 = por %p138, %p139
      %p141 = scmp.ne.s32.totalorder %s133, %s136
      %p142 = scmp.eq.s32.totalorder %s13, 0
      %p143 = por %p141, %p142
      %p144 = scmp.ne.s32.totalorder %s133, %s136
      %p145 = scmp.eq.s32.totalorder %s18, 1
      %p146 = por %p144, %p145
      %p147 = scmp.ne.s32.totalorder %s136, %s137
      %p148 = scmp.eq.s32.totalorder %s18, 0
      %p149 = por %p147, %p148
      %p150 = scmp.ne.s32.totalorder %s136, %s137
      %p151 = scmp.eq.s32.totalorder %s19, 1
      %p152 = por %p150, %p151
      %p154 = scmp.ne.s32.totalorder %s137, %s153
      %p155 = scmp.eq.s32.totalorder %s19, 0
      %p156 = por %p154, %p155
      %p157 = scmp.le.s32.totalorder 1, %s13
      %p158 = scmp.lt.s32.totalorder %s13, 3
      %p159 = pnand %p157, %p158
      %p160 = pneg %p159
      // Predicated region
      $region9: #{tpu_custom_call.1} parent=5 // pred_check
        _
      $region10: #{tpu_custom_call.1} parent=5 // pred_check_branch
        %162 = sbr.rel (%p159) target = $region12
      $region11: #{tpu_custom_call.1} parent=5 // pred_region
        %s163 = ssub.s32 %s13, 1
        // Predicated region
        $region13: #{tpu_custom_call.1} parent=11 // pred_check
          %p164 = pneg %p102
        $region14: #{tpu_custom_call.1} parent=11 // pred_check_branch
          %166 = sbr.rel (%p164) target = $region16
        $region15: #{tpu_custom_call.1} parent=11 // pred_region
          _
        $region16: #{tpu_custom_call.1} parent=11 // pred_fallthru
          _
        // Predicated region
        $region17: #{tpu_custom_call.1} parent=11 // pred_check
          %p167 = pneg %p123
        $region18: #{tpu_custom_call.1} parent=11 // pred_check_branch
          %169 = sbr.rel (%p167) target = $region20
        $region19: #{tpu_custom_call.1} parent=11 // pred_region
          _
        $region20: #{tpu_custom_call.1} parent=11 // pred_fallthru
          _
      $region12: #{tpu_custom_call.1} parent=5 // pred_fallthru
        _
      %p170 = scmp.lt.s32.totalorder %s13, 2
      // Predicated region
      $region21: #{tpu_custom_call.1} parent=5 // pred_check
        %p171 = pneg %p170
      $region22: #{tpu_custom_call.1} parent=5 // pred_check_branch
        %173 = sbr.rel (%p171) target = $region24
      $region23: #{tpu_custom_call.1} parent=5 // pred_region
        // Predicated region
        $region25: #{tpu_custom_call.1} parent=23 // pred_check
          %p174 = pneg %p47
        $region26: #{tpu_custom_call.1} parent=23 // pred_check_branch
          %176 = sbr.rel (%p174) target = $region28
        $region27: #{tpu_custom_call.1} parent=23 // pred_region
          %s177 = smul.u32 2, %s21
          %p178 = scmp.lt.s32.totalorder %s20, 1
          %s179 = scalar_select %p178, %s20, 1
          %p180 = scmp.lt.s32.totalorder %s177, 1
          %s181 = scalar_select %p180, %s177, 1
          %s182 = smul.addr %s179, 2
          %s183 = sadd.s32 %s181, %s182
          %s184 = smul.addr %s183, 4
          %s185 = scalar_lea.vmem %s0, %s184
          %s186 = smul.u32 2, %s21
        $region28: #{tpu_custom_call.1} parent=23 // pred_fallthru
          _
        // Predicated region
        $region29: #{tpu_custom_call.1} parent=23 // pred_check
          %p187 = pneg %p75
        $region30: #{tpu_custom_call.1} parent=23 // pred_check_branch
          %189 = sbr.rel (%p187) target = $region32
        $region31: #{tpu_custom_call.1} parent=23 // pred_region
          %s190 = sand.u32 %s65, 1
          %s191 = scalar_lea.sflag [#allocation3], %s190
          %s192 = sand.u32 %s65, 1
          %s193 = smul.addr %s192, 8
          %s194 = scalar_lea.vmem [#allocation2], %s193
          %s195 = smul.u32 2, %s21
          %s197 = ssub.s32 128, 128
          %198 = vsyncadd %s191, %s197
          %s199 = smul.addr %s20, 2
          %s200 = sadd.s32 %s195, %s199
          %s201 = smul.addr %s200, 64
          %s202 = scalar_lea.hbm %s1, %s201
          %s204 = sshll.u32 %s194, 4
          %s205 = int_to_ptr.vmem [resolvable:$true] %s204
          %207 = dma.hbm_to_vmem [thread:$0]  %s202, 128, %s205, %s191
        $region32: #{tpu_custom_call.1} parent=23 // pred_fallthru
          _
      $region24: #{tpu_custom_call.1} parent=5 // pred_fallthru
        _
      %p208 = scmp.le.s32.totalorder 1, %s13
      %p209 = scmp.lt.s32.totalorder %s13, 3
      %p210 = pnand %p208, %p209
      %p211 = pneg %p210
      // Predicated region
      $region33: #{tpu_custom_call.1} parent=5 // pred_check
        _
      $region34: #{tpu_custom_call.1} parent=5 // pred_check_branch
        %213 = sbr.rel (%p210) target = $region36
      $region35: #{tpu_custom_call.1} parent=5 // pred_region
        %s214 = ssub.s32 %s13, 1
        %s215 = sand.u32 %s68, 1
        %s216 = scalar_lea.sflag [#allocation3], %s215
        %s217 = sand.u32 %s68, 1
        %s218 = smul.addr %s217, 8
        %s219 = scalar_lea.vmem [#allocation2], %s218
        // Predicated region
        $region37: #{tpu_custom_call.1} parent=35 // pred_check
          %p220 = pneg %p81
        $region38: #{tpu_custom_call.1} parent=35 // pred_check_branch
          %222 = sbr.rel (%p220) target = $region40
        $region39: #{tpu_custom_call.1} parent=35 // pred_region
          %223 = dma.done %s216, 128
        $region40: #{tpu_custom_call.1} parent=35 // pred_fallthru
          _
        %s224 = smul.u32 2, %s23
        %p225 = scmp.lt.s32.totalorder %s22, 1
        %s226 = scalar_select %p225, %s22, 1
        %p227 = scmp.lt.s32.totalorder %s224, 1
        %s228 = scalar_select %p227, %s224, 1
        %s229 = smul.addr %s226, 2
        %s230 = sadd.s32 %s228, %s229
        %s231 = smul.addr %s230, 4
        %s232 = scalar_lea.vmem %s0, %s231
        %p233 = pneg %p53
        %p234 = pneg %p50
        %s235 = sand.u32 %s68, 1
        %s236 = scalar_lea.sflag [#allocation3], %s235
        %s237 = sand.u32 %s68, 1
        %s238 = smul.addr %s237, 8
        %s239 = scalar_lea.vmem [#allocation2], %s238
        %p240 = pneg %p81
        %p241 = pneg %p78
        %p242 = pneg %p102
        %p243 = pneg %p99
        %p244 = pneg %p123
        %p245 = pneg %p120
        %p246 = pneg %p149
        %p247 = pneg %p146
        %p248 = scmp.lt.s32.totalorder %s22, 1
        %s249 = scalar_select %p248, %s22, 1
        %s250 = smul.addr %s249, 8
        %s251 = scalar_lea.vmem %s4, %s250
        %s252 = smul.u32 2, %s23
        %p253 = scmp.lt.s32.totalorder %s22, 1
        %s254 = scalar_select %p253, %s22, 1
        %p255 = scmp.lt.s32.totalorder %s252, 1
        %s256 = scalar_select %p255, %s252, 1
        %s257 = smul.addr %s254, 2
        %s258 = sadd.s32 %s256, %s257
        %s259 = smul.addr %s258, 4
        %s260 = scalar_lea.vmem %s0, %s259
        %s261 = smul.u32 2, %s23
        %s262 = smul.u32 2, %s23
        %p263 = scmp.lt.s32.totalorder %s22, 1
        %s264 = scalar_select %p263, %s22, 1
        %s265 = smul.addr %s264, 8
        %s266 = scalar_lea.vmem %s4, %s265
        %p267 = scmp.eq.s32.totalorder %s23, 0
        // Predicated region
        $region41: #{tpu_custom_call.1} parent=35 // pred_check
          %p268 = pneg %p267
        $region42: #{tpu_custom_call.1} parent=35 // pred_check_branch
          %270 = sbr.rel (%p268) target = $region44
        $region43: #{tpu_custom_call.1} parent=35 // pred_region
          %vm271 = vcmask 31744
          %272 = vst.msk [vmem:[%s266] sm:$0xff] %vm271, 0.0
        $region44: #{tpu_custom_call.1} parent=35 // pred_fallthru
          _
        %v273 = vld [vmem:[%s2] sm:$0xff]
        %v274 = vld [vmem:[%s260] sm:$0xff]
        %v276 = vcombine.high %v274, %v274
        %vm277 = vcmask 31744
        %v279 = vsel %vm277, %v273, 0
        %vm281 = vcmask 1043456
        %v282 = vsel %vm281, %v274, 0
        %v284 = vsel %vm281, %v276, 0
        %286 = vmatprep.subr.mxu0 %v284
        %287 = vmatpush1.msra.mxu0 %v282
        %288 = vmatprep.subr.mxu0 0.0
        %289 = vmatpush1.msra.mxu0 0.0
        %290 = vmatprep.subr.mxu0 0.0
        %291 = vmatpush1.msra.mxu0 0.0
        %292 = vmatprep.subr.mxu0 0.0
        %293 = vmatpush1.msra.mxu0 0.0
        %294 = vmatprep.subr.mxu0 0.0
        %295 = vmatpush1.msra.mxu0 0.0
        %296 = vmatprep.subr.mxu0 0.0
        %297 = vmatpush1.msra.mxu0 0.0
        %298 = vmatprep.subr.mxu0 0.0
        %299 = vmatpush1.msra.mxu0 0.0
        %300 = vmatprep.subr.mxu0 0.0
        %301 = vmatpush1.msra.mxu0 0.0
        %302 = vmatprep.subr.mxu0 0.0
        %303 = vmatpush1.msra.mxu0 0.0
        %304 = vmatprep.subr.mxu0 0.0
        %305 = vmatpush1.msra.mxu0 0.0
        %306 = vmatprep.subr.mxu0 0.0
        %307 = vmatpush1.msra.mxu0 0.0
        %308 = vmatprep.subr.mxu0 0.0
        %309 = vmatpush1.msra.mxu0 0.0
        %310 = vmatprep.subr.mxu0 0.0
        %311 = vmatpush1.msra.mxu0 0.0
        %312 = vmatprep.subr.mxu0 0.0
        %313 = vmatpush1.msra.mxu0 0.0
        %314 = vmatprep.subr.mxu0 0.0
        %315 = vmatpush1.msra.mxu0 0.0
        %316 = vmatprep.subr.mxu0 0.0
        %317 = vmatpush1.msra.mxu0 0.0
        %318 = vmatprep.subr.mxu0 0.0
        %319 = vmatpush1.msra.mxu0 0.0
        %320 = vmatprep.subr.mxu0 0.0
        %321 = vmatpush1.msra.mxu0 0.0
        %322 = vmatprep.subr.mxu0 0.0
        %323 = vmatpush1.msra.mxu0 0.0
        %324 = vmatprep.subr.mxu0 0.0
        %325 = vmatpush1.msra.mxu0 0.0
        %326 = vmatprep.subr.mxu0 0.0
        %327 = vmatpush1.msra.mxu0 0.0
        %328 = vmatprep.subr.mxu0 0.0
        %329 = vmatpush1.msra.mxu0 0.0
        %330 = vmatprep.subr.mxu0 0.0
        %331 = vmatpush1.msra.mxu0 0.0
        %332 = vmatprep.subr.mxu0 0.0
        %333 = vmatpush1.msra.mxu0 0.0
        %334 = vmatprep.subr.mxu0 0.0
        %335 = vmatpush1.msra.mxu0 0.0
        %336 = vmatprep.subr.mxu0 0.0
        %337 = vmatpush1.msra.mxu0 0.0
        %338 = vmatprep.subr.mxu0 0.0
        %339 = vmatpush1.msra.mxu0 0.0
        %340 = vmatprep.subr.mxu0 0.0
        %341 = vmatpush1.msra.mxu0 0.0
        %342 = vmatprep.subr.mxu0 0.0
        %343 = vmatpush1.msra.mxu0 0.0
        %344 = vmatprep.subr.mxu0 0.0
        %345 = vmatpush1.msra.mxu0 0.0
        %346 = vmatprep.subr.mxu0 0.0
        %347 = vmatpush1.msra.mxu0 0.0
        %348 = vmatprep.subr.mxu0 0.0
        %349 = vmatpush1.msra.mxu0 0.0
        %350 = vmatprep.mubr.f32.mxu0 0.0
        %351 = vmatmul.mubr.f32.gmra.mrb[0].mxu0 %v279
        %v352 = vpop.f32.mrb[0].mxu0
        %v353 = vadd.f32 0.0, %v352
        %v354 = vpop.f32.mrb[0].mxu0
        %v355 = vadd.f32 0.0, %v354
        %356 = vdwg.mxu0
        %v357 = vld [vmem:[%s3] sm:$0xff]
        %v358 = vld [vmem:[%s219] sm:$0xff]
        %v360 = vcombine.high %v358, %v358
        %v362 = vsel %vm277, %v357, 0
        %v364 = vsel %vm281, %v358, 0
        %v366 = vsel %vm281, %v360, 0
        %368 = vmatprep.subr.mxu0 %v366
        %369 = vmatpush1.msra.mxu0 %v364
        %370 = vmatprep.subr.mxu0 0.0
        %371 = vmatpush1.msra.mxu0 0.0
        %372 = vmatprep.subr.mxu0 0.0
        %373 = vmatpush1.msra.mxu0 0.0
        %374 = vmatprep.subr.mxu0 0.0
        %375 = vmatpush1.msra.mxu0 0.0
        %376 = vmatprep.subr.mxu0 0.0
        %377 = vmatpush1.msra.mxu0 0.0
        %378 = vmatprep.subr.mxu0 0.0
        %379 = vmatpush1.msra.mxu0 0.0
        %380 = vmatprep.subr.mxu0 0.0
        %381 = vmatpush1.msra.mxu0 0.0
        %382 = vmatprep.subr.mxu0 0.0
        %383 = vmatpush1.msra.mxu0 0.0
        %384 = vmatprep.subr.mxu0 0.0
        %385 = vmatpush1.msra.mxu0 0.0
        %386 = vmatprep.subr.mxu0 0.0
        %387 = vmatpush1.msra.mxu0 0.0
        %388 = vmatprep.subr.mxu0 0.0
        %389 = vmatpush1.msra.mxu0 0.0
        %390 = vmatprep.subr.mxu0 0.0
        %391 = vmatpush1.msra.mxu0 0.0
        %392 = vmatprep.subr.mxu0 0.0
        %393 = vmatpush1.msra.mxu0 0.0
        %394 = vmatprep.subr.mxu0 0.0
        %395 = vmatpush1.msra.mxu0 0.0
        %396 = vmatprep.subr.mxu0 0.0
        %397 = vmatpush1.msra.mxu0 0.0
        %398 = vmatprep.subr.mxu0 0.0
        %399 = vmatpush1.msra.mxu0 0.0
        %400 = vmatprep.subr.mxu0 0.0
        %401 = vmatpush1.msra.mxu0 0.0
        %402 = vmatprep.subr.mxu0 0.0
        %403 = vmatpush1.msra.mxu0 0.0
        %404 = vmatprep.subr.mxu0 0.0
        %405 = vmatpush1.msra.mxu0 0.0
        %406 = vmatprep.subr.mxu0 0.0
        %407 = vmatpush1.msra.mxu0 0.0
        %408 = vmatprep.subr.mxu0 0.0
        %409 = vmatpush1.msra.mxu0 0.0
        %410 = vmatprep.subr.mxu0 0.0
        %411 = vmatpush1.msra.mxu0 0.0
        %412 = vmatprep.subr.mxu0 0.0
        %413 = vmatpush1.msra.mxu0 0.0
        %414 = vmatprep.subr.mxu0 0.0
        %415 = vmatpush1.msra.mxu0 0.0
        %416 = vmatprep.subr.mxu0 0.0
        %417 = vmatpush1.msra.mxu0 0.0
        %418 = vmatprep.subr.mxu0 0.0
        %419 = vmatpush1.msra.mxu0 0.0
        %420 = vmatprep.subr.mxu0 0.0
        %421 = vmatpush1.msra.mxu0 0.0
        %422 = vmatprep.subr.mxu0 0.0
        %423 = vmatpush1.msra.mxu0 0.0
        %424 = vmatprep.subr.mxu0 0.0
        %425 = vmatpush1.msra.mxu0 0.0
        %426 = vmatprep.subr.mxu0 0.0
        %427 = vmatpush1.msra.mxu0 0.0
        %428 = vmatprep.subr.mxu0 0.0
        %429 = vmatpush1.msra.mxu0 0.0
        %430 = vmatprep.subr.mxu0 0.0
        %431 = vmatpush1.msra.mxu0 0.0
        %432 = vmatprep.mubr.f32.mxu0 0.0
        %433 = vmatmul.mubr.f32.gmra.mrb[0].mxu0 %v362
        %v434 = vpop.f32.mrb[0].mxu0
        %v435 = vadd.f32 0.0, %v434
        %v436 = vpop.f32.mrb[0].mxu0
        %v437 = vadd.f32 0.0, %v436
        %438 = vdwg.mxu0
        %v439 = vld [vmem:[%s266] sm:$0xff]
        %v440 = vadd.f32 %v353, %v355
        %441 = vadd.xlane.f32.xlu0 %v440
        %v442 = vpop.xlane.xlu0 %441
        %v443 = vmul.f32 %v353, %v353
        %v444 = vmul.f32 %v355, %v355
        %v445 = vadd.f32 %v443, %v444
        %446 = vadd.xlane.f32.xlu0 %v445
        %v447 = vpop.xlane.xlu0 %446
        %v448 = vadd.f32 %v435, %v437
        %449 = vadd.xlane.f32.xlu0 %v448
        %v450 = vpop.xlane.xlu0 %449
        %v451 = vmul.f32 %v435, %v435
        %v452 = vmul.f32 %v437, %v437
        %v453 = vadd.f32 %v451, %v452
        %454 = vadd.xlane.f32.xlu0 %v453
        %v455 = vpop.xlane.xlu0 %454
        %vm456 = vcmask 7168
        %v457 = vsel %vm456, %v442, %v447
        %vm458 = vcmask 15360
        %v459 = vsel %vm458, %v457, %v450
        %vm460 = vcmask 23552
        %v461 = vsel %vm460, %v459, %v455
        %v462 = vadd.f32 %v439, %v461
        %463 = vst.msk [vmem:[%s266] sm:$0xff] %vm277, %v462
        %p464 = scmp.lt.s32.totalorder %s22, 1
        %s465 = scalar_select %p464, %s22, 1
        %s466 = smul.addr %s465, 8
        %s467 = scalar_lea.vmem %s4, %s466
        // Predicated region
        $region45: #{tpu_custom_call.1} parent=35 // pred_check
          %p468 = pneg %p146
        $region46: #{tpu_custom_call.1} parent=35 // pred_check_branch
          %470 = sbr.rel (%p468) target = $region48
        $region47: #{tpu_custom_call.1} parent=35 // pred_region
          _
        $region48: #{tpu_custom_call.1} parent=35 // pred_fallthru
          _
      $region36: #{tpu_custom_call.1} parent=5 // pred_fallthru
        _
      %p471 = scmp.le.s32.totalorder 2, %s13
      // Predicated region
      $region49: #{tpu_custom_call.1} parent=5 // pred_check
        %p472 = pneg %p471
      $region50: #{tpu_custom_call.1} parent=5 // pred_check_branch
        %474 = sbr.rel (%p472) target = $region52
      $region51: #{tpu_custom_call.1} parent=5 // pred_region
        %s475 = ssub.s32 %s13, 2
        // Predicated region
        $region53: #{tpu_custom_call.1} parent=51 // pred_check
          %p476 = pneg %p152
        $region54: #{tpu_custom_call.1} parent=51 // pred_check_branch
          %478 = sbr.rel (%p476) target = $region56
        $region55: #{tpu_custom_call.1} parent=51 // pred_region
          %p479 = scmp.lt.s32.totalorder %s24, 1
          %s480 = scalar_select %p479, %s24, 1
          %s481 = smul.addr %s480, 8
          %s482 = scalar_lea.vmem %s4, %s481
        $region56: #{tpu_custom_call.1} parent=51 // pred_fallthru
          _
      $region52: #{tpu_custom_call.1} parent=5 // pred_fallthru
        _
    $region6: #{tpu_custom_call.1} parent=1 // loop_footer
      %s17 = sadd.s32 1, %s13
    $region7: #{tpu_custom_call.1} parent=1 // loop_footer_branch
      %12 = sbr.rel target = $region3
    $region8: #{tpu_custom_call.1} parent=1 // loop_exit
      _
    %483 = vsyncpa [#allocation3], 1
    %s484 = scalar_lea.sflag [#allocation3], 1
    %485 = vsyncpa %s484, 1

</llo_original>
